<compile_context>
chip_gen: v7x
topology: tpu7x:2x2x1
jax: 0.10.0
libtpu: 0.0.40
codegen_flags: <defaults>
</compile_context>

<pallas_src>
import functools

import jax
import jax.numpy as jnp
from jax import lax
from jax.experimental import pallas as pl
from jax.experimental.pallas import tpu as pltpu


def _round_up(a, b):
    return (a + b - 1) // b * b


def _vmem_limit_bytes():
    """Generation-aware scoped-VMEM limit with a v7x-safe fallback."""
    phys = None
    try:
        phys = getattr(pltpu.get_tpu_info(), "vmem_capacity_bytes", None)
    except Exception:
        phys = None
    if not phys or phys <= 0:
        phys = 64 * 1024 * 1024          # v7x per-TC capacity: safe floor everywhere
    # v5e/v6e (128 MiB physical) -> 48 MiB; v7x (64 MiB) -> 32 MiB.
    return min(phys // 2, 48 * 1024 * 1024)


def _choose_tile_lanes(m_cols, n_rows, dtype, vmem_limit, max_lanes=None):
    """Largest multiple-of-128 lane width whose pipelined VMEM footprint fits
    half the scoped limit. Accounts for sublane padding of the N rows
    (f32 -> 8, bf16 -> 16, int8 -> 32) plus ~2 f32 temporaries from the
    centered-variance math."""
    itemsize = jnp.dtype(dtype).itemsize
    sublane = max(8, 8 * (4 // itemsize))
    n_pad = _round_up(n_rows, sublane)
    # 2x double-buffered input tile + 2x double-buffered output tile (input
    # dtype) + ~2 live f32 temporaries (x_f32, centered diff).
    bytes_per_lane = n_pad * (4 * itemsize + 2 * 4)
    budget = vmem_limit // 2             # leave headroom for compiler temps
    lanes = max(128, (budget // bytes_per_lane) // 128 * 128)
    if max_lanes is not None:
        lanes = min(lanes, max(128, max_lanes // 128 * 128))
    return min(lanes, _round_up(m_cols, 128))


def _make_stream_kernel(n_rows, tm, num_blocks, rem_cols):
    inv_n = 1.0 / n_rows
    inv_nm1 = (1.0 / (n_rows - 1)) if n_rows > 1 else float("nan")  # torch.std unbiased

    def kernel(x_ref, slab_ref, part_ref):
        x = x_ref[...]                                     # (N, TM), input dtype
        xf = x.astype(jnp.float32)
        # Centered (two-pass) unbiased variance over the batch axis: the tile
        # is resident, so the extra VPU pass costs no extra HBM traffic and
        # avoids cancellation when |mean| >> std.
        mean = jnp.sum(xf, axis=0, keepdims=True) * inv_n  # (1, TM)
        d = xf - mean
        var = jnp.sum(d * d, axis=0, keepdims=True) * inv_nm1
        std = jnp.sqrt(var)                                # (1, TM), per-column std
        if rem_cols:
            # Last block is ragged (TM does not divide M): mask OOB lanes out
            # of the reduction (their DMA'd contents are undefined).
            j = pl.program_id(0)
            lane = lax.broadcasted_iota(jnp.int32, std.shape, 1)
            limit = jnp.where(j == num_blocks - 1, rem_cols, tm)
            std = jnp.where(lane < limit, std, 0.0)
        # One cross-lane reduce per block (XLU, hidden behind the DMAs);
        # broadcast so the partials block stays a lane-dense (1, 128) store.
        part_ref[...] = jnp.broadcast_to(
            jnp.sum(std, axis=1, keepdims=True), part_ref.shape)
        slab_ref[...] = x                                  # pass-through, no dtype round-trip

    return kernel


def _make_fill_kernel(boundary):
    def kernel(stat_ref, slab_in_ref, slab_out_ref):
        stat = stat_ref[...]                               # (1, 1) f32
        vals = jnp.broadcast_to(stat, slab_out_ref.shape).astype(slab_out_ref.dtype)
        if boundary:
            # First block straddles the x | stat boundary: keep the x lanes
            # (already written by pass 1, read back via the alias) and fill
            # the rest with the statistic.
            j = pl.program_id(0)
            lane = lax.broadcasted_iota(jnp.int32, slab_out_ref.shape, 1)
            limit = jnp.where(j == 0, boundary, 0)
            slab_out_ref[...] = jnp.where(lane < limit, slab_in_ref[...], vals)
        else:
            slab_out_ref[...] = vals

    return kernel


@functools.partial(jax.jit, static_argnames=("max_lanes",))
def minibatch_stat_concat(x, max_lanes=None):
    """MinibatchStatConcatLayer forward: (N, C, H, W) -> (N, C+1, H, W)."""
    N, C, H, W = x.shape
    HW = H * W
    M = C * HW
    Mout = M + HW
    dtype = x.dtype
    itemsize = jnp.dtype(dtype).itemsize

    vmem_limit = _vmem_limit_bytes()
    TM = _choose_tile_lanes(M, N, dtype, vmem_limit, max_lanes)
    G = pl.cdiv(M, TM)            # streaming blocks over the x columns
    rem = M % TM                  # ragged x lanes in the last streaming block
    fsb = M // TM                 # first slab block containing stat lanes
    T = pl.cdiv(Mout, TM)         # total slab blocks

    x2 = x.reshape(N, M)

    # ---- Pass 1: stream x into slab[:, :M] and emit per-block std partials.
    # Stateless per block -> the column axis is "parallel" (both TCs on v7x).
    stream = _make_stream_kernel(N, TM, G, rem)
    cost = pl.CostEstimate(
        flops=5 * N * M + 4 * M,
        transcendentals=M,
        bytes_accessed=2 * N * M * itemsize + G * 128 * 4,
    )
    slab, partials = pl.pallas_call(
        stream,
        out_shape=(jax.ShapeDtypeStruct((N, Mout), dtype),
                   jax.ShapeDtypeStruct((1, 128 * G), jnp.float32)),
        grid=(G,),
        in_specs=[pl.BlockSpec((N, TM), lambda j: (0, j))],
        out_specs=(pl.BlockSpec((N, TM), lambda j: (0, j)),
                   pl.BlockSpec((1, 128), lambda j: (0, j))),
        compiler_params=pltpu.CompilerParams(
            dimension_semantics=("parallel",),
            vmem_limit_bytes=vmem_limit),
        cost_estimate=cost,
    )(x2)

    # ---- Tiny combine (G values, each replicated over 128 lanes).
    stat = (jnp.sum(partials, dtype=jnp.float32) / (128.0 * M)).reshape(1, 1)

    # ---- Pass 2: fill slab[:, M:] with the statistic, aliased in place onto
    # the slab so the pass-through data is never copied again.
    fill = _make_fill_kernel(rem)
    out2 = pl.pallas_call(
        fill,
        out_shape=jax.ShapeDtypeStruct((N, Mout), dtype),
        grid=(T - fsb,),
        in_specs=[pl.BlockSpec((1, 1), lambda j: (0, 0)),
                  pl.BlockSpec((N, TM), lambda j: (0, fsb))],
        out_specs=pl.BlockSpec((N, TM), lambda j: (0, fsb + j)),
        input_output_aliases={1: 0},
        compiler_params=pltpu.CompilerParams(
            dimension_semantics=("arbitrary",),
            vmem_limit_bytes=vmem_limit),
    )(stat, slab)

    # Free view: first C*HW lanes are x (channel-major), last HW lanes the stat.
    return out2.reshape(N, C + 1, H, W)


def _reference(x):
    # Pure-JAX reference mirroring torch semantics (unbiased std over batch).
    std = jnp.std(x, axis=0, keepdims=True, ddof=1)
    stat = jnp.mean(std)
    vals = jnp.full((x.shape[0], 1, x.shape[2], x.shape[3]), stat, dtype=x.dtype)
    return jnp.concatenate([x, vals], axis=1)


if __name__ == "__main__":
    key = jax.random.PRNGKey(0)
    N, C, H, W = 2, 4, 16, 16
    x = jax.random.normal(key, (N, C, H, W), dtype=jnp.float32)

    out = jax.block_until_ready(minibatch_stat_concat(x))
    ref = _reference(x)
    assert out.shape == (N, C + 1, H, W)
    assert jnp.allclose(out, ref, atol=1e-5, rtol=1e-5), "mismatch vs reference"

    # Ragged case: M = 300 not a multiple of 128; max_lanes forces several
    # blocks so the masked boundary block and stat blend paths are exercised.
    x2 = jax.random.normal(jax.random.PRNGKey(1), (3, 3, 10, 10), dtype=jnp.float32)
    out2 = jax.block_until_ready(minibatch_stat_concat(x2, max_lanes=128))
    assert out2.shape == (3, 4, 10, 10)
    assert jnp.allclose(out2, _reference(x2), atol=1e-5, rtol=1e-5), "ragged mismatch"

    print("KERNEL_OK")
</pallas_src>

<mosaic_0001>
module attributes {stable_mosaic.version = 11 : i64} {
  func.func @kernel(%arg0: i32, %arg1: memref<2x1024xf32, #tpu.memory_space<vmem>>, %arg2: memref<2x1024xf32, #tpu.memory_space<vmem>>, %arg3: memref<1x128xf32, #tpu.memory_space<vmem>>) attributes {dimension_semantics = [#tpu.dimension_semantics<parallel>], iteration_bounds = array<i64: 1>, scalar_prefetch = 0 : i64, scratch_operands = 0 : i64, tpu.core_type = #tpu.core_type<tc>, window_params = [{transform_indices = @transform_0, window_bounds = array<i64: 2, 1024>}, {transform_indices = @transform_1, window_bounds = array<i64: 2, 1024>}, {transform_indices = @transform_2, window_bounds = array<i64: 1, 128>}]} {
    %c0 = arith.constant 0 : index
    %c0_0 = arith.constant 0 : index
    %0 = vector.load %arg1[%c0, %c0_0] : memref<2x1024xf32, #tpu.memory_space<vmem>>, vector<2x1024xf32>
    %cst = arith.constant dense<0.000000e+00> : vector<1024xf32>
    %1 = vector.multi_reduction <add>, %0, %cst [0] : vector<2x1024xf32> to vector<1024xf32>
    %2 = vector.shape_cast %1 : vector<1024xf32> to vector<1x1024xf32>
    %cst_1 = arith.constant 5.000000e-01 : f32
    %3 = vector.broadcast %cst_1 : f32 to vector<1x1024xf32>
    %4 = arith.mulf %2, %3 : vector<1x1024xf32>
    %5 = vector.broadcast %4 : vector<1x1024xf32> to vector<2x1024xf32>
    %6 = arith.subf %0, %5 : vector<2x1024xf32>
    %7 = arith.mulf %6, %6 : vector<2x1024xf32>
    %cst_2 = arith.constant dense<0.000000e+00> : vector<1024xf32>
    %8 = vector.multi_reduction <add>, %7, %cst_2 [0] : vector<2x1024xf32> to vector<1024xf32>
    %9 = vector.shape_cast %8 : vector<1024xf32> to vector<1x1024xf32>
    %cst_3 = arith.constant 1.000000e+00 : f32
    %10 = vector.broadcast %cst_3 : f32 to vector<1x1024xf32>
    %11 = arith.mulf %9, %10 : vector<1x1024xf32>
    %12 = math.sqrt %11 : vector<1x1024xf32>
    %cst_4 = arith.constant dense<0.000000e+00> : vector<1xf32>
    %13 = vector.multi_reduction <add>, %12, %cst_4 [1] : vector<1x1024xf32> to vector<1xf32>
    %14 = vector.shape_cast %13 : vector<1xf32> to vector<1x1xf32>
    %15 = vector.shape_cast %14 : vector<1x1xf32> to vector<1x1xf32>
    %16 = vector.broadcast %15 : vector<1x1xf32> to vector<1x128xf32>
    %c0_5 = arith.constant 0 : index
    %c0_6 = arith.constant 0 : index
    %17 = vector.load %arg3[%c0_5, %c0_6] : memref<1x128xf32, #tpu.memory_space<vmem>>, vector<1x128xf32>
    tpu.vector_store %arg3[%c0_5, %c0_6], %16 {strides = array<i32>} : memref<1x128xf32, #tpu.memory_space<vmem>>, vector<1x128xf32>,
    %c0_7 = arith.constant 0 : index
    %c0_8 = arith.constant 0 : index
    %18 = vector.load %arg2[%c0_7, %c0_8] : memref<2x1024xf32, #tpu.memory_space<vmem>>, vector<2x1024xf32>
    tpu.vector_store %arg2[%c0_7, %c0_8], %0 {strides = array<i32>} : memref<2x1024xf32, #tpu.memory_space<vmem>>, vector<2x1024xf32>,
    return
  }
  func.func @transform_0(%arg0: i32) -> (i32, i32) {
    %c0_i32 = arith.constant 0 : i32
    %c0_i32_0 = arith.constant 0 : i32
    return %c0_i32, %arg0 : i32, i32
  }
  func.func @transform_1(%arg0: i32) -> (i32, i32) {
    %c0_i32 = arith.constant 0 : i32
    %c0_i32_0 = arith.constant 0 : i32
    return %c0_i32, %arg0 : i32, i32
  }
  func.func @transform_2(%arg0: i32) -> (i32, i32) {
    %c0_i32 = arith.constant 0 : i32
    %c0_i32_0 = arith.constant 0 : i32
    return %c0_i32, %arg0 : i32, i32
  }
}

module attributes {stable_mosaic.version = 11 : i64} {
  func.func @kernel(%arg0: i32, %arg1: memref<1x1xf32, #tpu.memory_space<vmem>>, %arg2: memref<2x1024xf32, #tpu.memory_space<vmem>>, %arg3: memref<2x1024xf32, #tpu.memory_space<vmem>>) attributes {dimension_semantics = [#tpu.dimension_semantics<arbitrary>], iteration_bounds = array<i64: 1>, scalar_prefetch = 0 : i64, scratch_operands = 0 : i64, tpu.core_type = #tpu.core_type<tc>, window_params = [{pipeline_mode = #tpu.pipeline_mode<synchronous>, transform_indices = @transform_0, window_bounds = array<i64: 1, 1>}, {transform_indices = @transform_1, window_bounds = array<i64: 2, 1024>}, {transform_indices = @transform_2, window_bounds = array<i64: 2, 1024>}]} {
    %c0 = arith.constant 0 : index
    %c0_0 = arith.constant 0 : index
    %0 = vector.load %arg1[%c0, %c0_0] : memref<1x1xf32, #tpu.memory_space<vmem>>, vector<1x1xf32>
    %1 = vector.shape_cast %0 : vector<1x1xf32> to vector<1x1xf32>
    %2 = vector.broadcast %1 : vector<1x1xf32> to vector<2x1024xf32>
    %c0_1 = arith.constant 0 : index
    %c0_2 = arith.constant 0 : index
    %3 = vector.load %arg3[%c0_1, %c0_2] : memref<2x1024xf32, #tpu.memory_space<vmem>>, vector<2x1024xf32>
    tpu.vector_store %arg3[%c0_1, %c0_2], %2 {strides = array<i32>} : memref<2x1024xf32, #tpu.memory_space<vmem>>, vector<2x1024xf32>,
    return
  }
  func.func @transform_0(%arg0: i32) -> (i32, i32) {
    %c0_i32 = arith.constant 0 : i32
    %c0_i32_0 = arith.constant 0 : i32
    %c0_i32_1 = arith.constant 0 : i32
    return %c0_i32, %c0_i32_0 : i32, i32
  }
  func.func @transform_1(%arg0: i32) -> (i32, i32) {
    %c0_i32 = arith.constant 0 : i32
    %c1_i32 = arith.constant 1 : i32
    %c0_i32_0 = arith.constant 0 : i32
    return %c0_i32, %c1_i32 : i32, i32
  }
  func.func @transform_2(%arg0: i32) -> (i32, i32) {
    %c1_i32 = arith.constant 1 : i32
    %0 = arith.addi %c1_i32, %arg0 : i32
    %c0_i32 = arith.constant 0 : i32
    %c0_i32_0 = arith.constant 0 : i32
    return %c0_i32, %0 : i32, i32
  }
}

</mosaic_0001>

<llo_original>
// kernel: minibatch_stat_concat.2
$region0: #{minibatch_stat_concat.2}
  #allocation0 [shape = 'u32[]', space=smem, size = 0x4, offset = 0x4, fixed_abs, tag = 'smem constant byte address 0x4 - core index']
  #allocation1 [shape = 'u32[144,128]{1,0:T(1,128)}', space=vmem, size = 0x12000, scoped, tag = 'internal scratch']
  %s0 = inlined_call_operand.vmem [shape: f32[2,1024], index: 0, kind: input, shape index: {}]
  %s1 = inlined_call_operand.vmem [shape: f32[2,1280], index: 1, kind: output, shape index: {0}]
  %s2 = inlined_call_operand.vmem [shape: f32[1,128], index: 2, kind: output, shape index: {1}]
  %3 = xla_tuple %s1, %s2
  %s4 = sld [smem:[#allocation0]]
  $region41: #{minibatch_stat_concat.2} parent=0
    _
  %s6 = ssub.s32 1, %s4
  %s7 = scalar_select 0, %s6, %s4
  $region1: #{minibatch_stat_concat.2} parent=0
    #allocation2 [shape = 'u8[8192]{0}', space=vmem, size = 0x2000, scoped, tag = 'output window, operand 0, single buffered']
    // Predicated region
    $region2: #{minibatch_stat_concat.2} parent=1 // pred_check
      _
    $region3: #{minibatch_stat_concat.2} parent=1 // pred_check_branch
      %9 = sbr.rel (0) target = $region5
    $region4: #{minibatch_stat_concat.2} parent=1 // pred_region
      _
    $region5: #{minibatch_stat_concat.2} parent=1 // pred_fallthru
      _
    %v10 = vld [vmem:[%s0] sm:$0xff]
    %v11 = vld [vmem:[%s0 + $0x8] sm:$0xff]
    %v14 = vcombine.high %v10, %v10
    %v16 = vunpack.c.l.s4 1983009808
    %v17 = vunpack.c.0.s8 %v16
    %v18 = vlaneseq
    %v19 = vshrl.u32 %v18, 7
    %v20 = vsub.s32 %v17, %v19
    %v21 = vrot.slane %v10, %v20
    %v23 = vunpack.c.l.s4 1983009808
    %v24 = vunpack.c.0.s8 %v23
    %v25 = vlaneseq
    %v26 = vshrl.u32 %v25, 7
    %v27 = vsub.s32 %v24, %v26
    %v28 = vrot.slane %v14, %v27
    %v29 = vcombine.high %v21, %v21
    %v30 = vcombine.high %v28, %v28
    %v31 = vcombine.high %v11, %v11
    %v33 = vunpack.c.l.s4 1983009808
    %v34 = vunpack.c.0.s8 %v33
    %v35 = vlaneseq
    %v36 = vshrl.u32 %v35, 7
    %v37 = vsub.s32 %v34, %v36
    %v38 = vrot.slane %v11, %v37
    %v40 = vunpack.c.l.s4 1983009808
    %v41 = vunpack.c.0.s8 %v40
    %v42 = vlaneseq
    %v43 = vshrl.u32 %v42, 7
    %v44 = vsub.s32 %v41, %v43
    %v45 = vrot.slane %v31, %v44
    %v46 = vcombine.high %v38, %v38
    %v47 = vcombine.high %v45, %v45
    %vm56 = vcmask 1041408
    %v57 = vsel %vm56, %v21, 0.0
    %v58 = vrot.slane %v57, 4
    %v59 = vadd.f32 %v57, %v58
    %v60 = vrot.slane %v59, 2
    %v61 = vadd.f32 %v59, %v60
    %v62 = vrot.slane %v61, 1
    %v63 = vadd.f32 %v61, %v62
    %v64 = vsel %vm56, %v29, 0.0
    %v65 = vrot.slane %v64, 4
    %v66 = vadd.f32 %v64, %v65
    %v67 = vrot.slane %v66, 2
    %v68 = vadd.f32 %v66, %v67
    %v69 = vrot.slane %v68, 1
    %v70 = vadd.f32 %v68, %v69
    %v71 = vsel %vm56, %v28, 0.0
    %v72 = vrot.slane %v71, 4
    %v73 = vadd.f32 %v71, %v72
    %v74 = vrot.slane %v73, 2
    %v75 = vadd.f32 %v73, %v74
    %v76 = vrot.slane %v75, 1
    %v77 = vadd.f32 %v75, %v76
    %v78 = vsel %vm56, %v30, 0.0
    %v79 = vrot.slane %v78, 4
    %v80 = vadd.f32 %v78, %v79
    %v81 = vrot.slane %v80, 2
    %v82 = vadd.f32 %v80, %v81
    %v83 = vrot.slane %v82, 1
    %v84 = vadd.f32 %v82, %v83
    %v85 = vsel %vm56, %v38, 0.0
    %v86 = vrot.slane %v85, 4
    %v87 = vadd.f32 %v85, %v86
    %v88 = vrot.slane %v87, 2
    %v89 = vadd.f32 %v87, %v88
    %v90 = vrot.slane %v89, 1
    %v91 = vadd.f32 %v89, %v90
    %v92 = vsel %vm56, %v46, 0.0
    %v93 = vrot.slane %v92, 4
    %v94 = vadd.f32 %v92, %v93
    %v95 = vrot.slane %v94, 2
    %v96 = vadd.f32 %v94, %v95
    %v97 = vrot.slane %v96, 1
    %v98 = vadd.f32 %v96, %v97
    %v99 = vsel %vm56, %v45, 0.0
    %v100 = vrot.slane %v99, 4
    %v101 = vadd.f32 %v99, %v100
    %v102 = vrot.slane %v101, 2
    %v103 = vadd.f32 %v101, %v102
    %v104 = vrot.slane %v103, 1
    %v105 = vadd.f32 %v103, %v104
    %v106 = vsel %vm56, %v47, 0.0
    %v107 = vrot.slane %v106, 4
    %v108 = vadd.f32 %v106, %v107
    %v109 = vrot.slane %v108, 2
    %v110 = vadd.f32 %v108, %v109
    %v111 = vrot.slane %v110, 1
    %v112 = vadd.f32 %v110, %v111
    %v113 = vmul.f32 %v63, 0.5
    %v114 = vmul.f32 %v70, 0.5
    %v115 = vmul.f32 %v77, 0.5
    %v116 = vmul.f32 %v84, 0.5
    %v117 = vmul.f32 %v91, 0.5
    %v118 = vmul.f32 %v98, 0.5
    %v119 = vmul.f32 %v105, 0.5
    %v120 = vmul.f32 %v112, 0.5
    %v129 = vcombine.low %v113, %v114
    %v130 = vcombine.low %v115, %v116
    %v132 = vunpack.c.l.s4 1983009808
    %v133 = vunpack.c.0.s8 %v132
    %v134 = vlaneseq
    %v135 = vshrl.u32 %v134, 7
    %v136 = vsub.s32 %v133, %v135
    %v137 = vrot.slane %v129, %v136
    %v139 = vunpack.c.l.s4 1983009808
    %v140 = vunpack.c.0.s8 %v139
    %v141 = vlaneseq
    %v142 = vshrl.u32 %v141, 7
    %v143 = vsub.s32 %v140, %v142
    %v144 = vrot.slane %v130, %v143
    %v145 = vcombine.low %v137, %v144
    %v146 = vcombine.low %v117, %v118
    %v147 = vcombine.low %v119, %v120
    %v149 = vunpack.c.l.s4 1983009808
    %v150 = vunpack.c.0.s8 %v149
    %v151 = vlaneseq
    %v152 = vshrl.u32 %v151, 7
    %v153 = vsub.s32 %v150, %v152
    %v154 = vrot.slane %v146, %v153
    %v156 = vunpack.c.l.s4 1983009808
    %v157 = vunpack.c.0.s8 %v156
    %v158 = vlaneseq
    %v159 = vshrl.u32 %v158, 7
    %v160 = vsub.s32 %v157, %v159
    %v161 = vrot.slane %v147, %v160
    %v162 = vcombine.low %v154, %v161
    %v165 = vsub.f32 %v10, %v145
    %v166 = vsub.f32 %v11, %v162
    %v167 = vmul.f32 %v165, %v165
    %v168 = vmul.f32 %v166, %v166
    %v171 = vcombine.high %v167, %v167
    %v173 = vunpack.c.l.s4 1983009808
    %v174 = vunpack.c.0.s8 %v173
    %v175 = vlaneseq
    %v176 = vshrl.u32 %v175, 7
    %v177 = vsub.s32 %v174, %v176
    %v178 = vrot.slane %v167, %v177
    %v180 = vunpack.c.l.s4 1983009808
    %v181 = vunpack.c.0.s8 %v180
    %v182 = vlaneseq
    %v183 = vshrl.u32 %v182, 7
    %v184 = vsub.s32 %v181, %v183
    %v185 = vrot.slane %v171, %v184
    %v186 = vcombine.high %v178, %v178
    %v187 = vcombine.high %v185, %v185
    %v188 = vcombine.high %v168, %v168
    %v190 = vunpack.c.l.s4 1983009808
    %v191 = vunpack.c.0.s8 %v190
    %v192 = vlaneseq
    %v193 = vshrl.u32 %v192, 7
    %v194 = vsub.s32 %v191, %v193
    %v195 = vrot.slane %v168, %v194
    %v197 = vunpack.c.l.s4 1983009808
    %v198 = vunpack.c.0.s8 %v197
    %v199 = vlaneseq
    %v200 = vshrl.u32 %v199, 7
    %v201 = vsub.s32 %v198, %v200
    %v202 = vrot.slane %v188, %v201
    %v203 = vcombine.high %v195, %v195
    %v204 = vcombine.high %v202, %v202
    %v213 = vsel %vm56, %v178, 0.0
    %v214 = vrot.slane %v213, 4
    %v215 = vadd.f32 %v213, %v214
    %v216 = vrot.slane %v215, 2
    %v217 = vadd.f32 %v215, %v216
    %v218 = vrot.slane %v217, 1
    %v219 = vadd.f32 %v217, %v218
    %v220 = vsel %vm56, %v186, 0.0
    %v221 = vrot.slane %v220, 4
    %v222 = vadd.f32 %v220, %v221
    %v223 = vrot.slane %v222, 2
    %v224 = vadd.f32 %v222, %v223
    %v225 = vrot.slane %v224, 1
    %v226 = vadd.f32 %v224, %v225
    %v227 = vsel %vm56, %v185, 0.0
    %v228 = vrot.slane %v227, 4
    %v229 = vadd.f32 %v227, %v228
    %v230 = vrot.slane %v229, 2
    %v231 = vadd.f32 %v229, %v230
    %v232 = vrot.slane %v231, 1
    %v233 = vadd.f32 %v231, %v232
    %v234 = vsel %vm56, %v187, 0.0
    %v235 = vrot.slane %v234, 4
    %v236 = vadd.f32 %v234, %v235
    %v237 = vrot.slane %v236, 2
    %v238 = vadd.f32 %v236, %v237
    %v239 = vrot.slane %v238, 1
    %v240 = vadd.f32 %v238, %v239
    %v241 = vsel %vm56, %v195, 0.0
    %v242 = vrot.slane %v241, 4
    %v243 = vadd.f32 %v241, %v242
    %v244 = vrot.slane %v243, 2
    %v245 = vadd.f32 %v243, %v244
    %v246 = vrot.slane %v245, 1
    %v247 = vadd.f32 %v245, %v246
    %v248 = vsel %vm56, %v203, 0.0
    %v249 = vrot.slane %v248, 4
    %v250 = vadd.f32 %v248, %v249
    %v251 = vrot.slane %v250, 2
    %v252 = vadd.f32 %v250, %v251
    %v253 = vrot.slane %v252, 1
    %v254 = vadd.f32 %v252, %v253
    %v255 = vsel %vm56, %v202, 0.0
    %v256 = vrot.slane %v255, 4
    %v257 = vadd.f32 %v255, %v256
    %v258 = vrot.slane %v257, 2
    %v259 = vadd.f32 %v257, %v258
    %v260 = vrot.slane %v259, 1
    %v261 = vadd.f32 %v259, %v260
    %v262 = vsel %vm56, %v204, 0.0
    %v263 = vrot.slane %v262, 4
    %v264 = vadd.f32 %v262, %v263
    %v265 = vrot.slane %v264, 2
    %v266 = vadd.f32 %v264, %v265
    %v267 = vrot.slane %v266, 1
    %v268 = vadd.f32 %v266, %v267
    %v269 = vrsqrt.pop %v219
    %v270 = vmul.f32 %v219, %v269
    %vm271 = vcmp.eq.f32.partialorder %v219, inf
    %v272 = vsel %vm271, %v219, %v270
    %vm273 = vcmp.eq.f32.partialorder %v219, 0.0
    %v274 = vand.u32 %v219, 2147483648
    %v275 = vsel %vm273, %v274, %v272
    %v276 = vrsqrt.pop %v226
    %v277 = vmul.f32 %v226, %v276
    %vm278 = vcmp.eq.f32.partialorder %v226, inf
    %v279 = vsel %vm278, %v226, %v277
    %vm280 = vcmp.eq.f32.partialorder %v226, 0.0
    %v281 = vand.u32 %v226, 2147483648
    %v282 = vsel %vm280, %v281, %v279
    %v283 = vrsqrt.pop %v233
    %v284 = vmul.f32 %v233, %v283
    %vm285 = vcmp.eq.f32.partialorder %v233, inf
    %v286 = vsel %vm285, %v233, %v284
    %vm287 = vcmp.eq.f32.partialorder %v233, 0.0
    %v288 = vand.u32 %v233, 2147483648
    %v289 = vsel %vm287, %v288, %v286
    %v290 = vrsqrt.pop %v240
    %v291 = vmul.f32 %v240, %v290
    %vm292 = vcmp.eq.f32.partialorder %v240, inf
    %v293 = vsel %vm292, %v240, %v291
    %vm294 = vcmp.eq.f32.partialorder %v240, 0.0
    %v295 = vand.u32 %v240, 2147483648
    %v296 = vsel %vm294, %v295, %v293
    %v297 = vrsqrt.pop %v247
    %v298 = vmul.f32 %v247, %v297
    %vm299 = vcmp.eq.f32.partialorder %v247, inf
    %v300 = vsel %vm299, %v247, %v298
    %vm301 = vcmp.eq.f32.partialorder %v247, 0.0
    %v302 = vand.u32 %v247, 2147483648
    %v303 = vsel %vm301, %v302, %v300
    %v304 = vrsqrt.pop %v254
    %v305 = vmul.f32 %v254, %v304
    %vm306 = vcmp.eq.f32.partialorder %v254, inf
    %v307 = vsel %vm306, %v254, %v305
    %vm308 = vcmp.eq.f32.partialorder %v254, 0.0
    %v309 = vand.u32 %v254, 2147483648
    %v310 = vsel %vm308, %v309, %v307
    %v311 = vrsqrt.pop %v261
    %v312 = vmul.f32 %v261, %v311
    %vm313 = vcmp.eq.f32.partialorder %v261, inf
    %v314 = vsel %vm313, %v261, %v312
    %vm315 = vcmp.eq.f32.partialorder %v261, 0.0
    %v316 = vand.u32 %v261, 2147483648
    %v317 = vsel %vm315, %v316, %v314
    %v318 = vrsqrt.pop %v268
    %v319 = vmul.f32 %v268, %v318
    %vm320 = vcmp.eq.f32.partialorder %v268, inf
    %v321 = vsel %vm320, %v268, %v319
    %vm322 = vcmp.eq.f32.partialorder %v268, 0.0
    %v323 = vand.u32 %v268, 2147483648
    %v324 = vsel %vm322, %v323, %v321
    %v325 = vadd.f32 %v275, %v282
    %v326 = vadd.f32 %v325, %v289
    %v327 = vadd.f32 %v326, %v296
    %v328 = vadd.f32 %v327, %v303
    %v329 = vadd.f32 %v328, %v310
    %v330 = vadd.f32 %v329, %v317
    %v331 = vadd.f32 %v330, %v324
    %332 = vadd.xlane.f32.xlu0 %v331
    %v333 = vpop.xlane.xlu0 %332
    %334 = vst [vmem:[%s2] sm:$0x1] %v333
    %335 = vst [vmem:[#allocation2] sm:$0xff] %v10
    %336 = vst [vmem:[#allocation2 + $0x8] sm:$0xff] %v11
    // Predicated region
    $region6: #{minibatch_stat_concat.2} parent=1 // pred_check
      _
    $region7: #{minibatch_stat_concat.2} parent=1 // pred_check_branch
      %338 = sbr.rel (0) target = $region9
    $region8: #{minibatch_stat_concat.2} parent=1 // pred_region
      // Predicated region
      $region10: #{minibatch_stat_concat.2} parent=8 // pred_check
        _
      $region11: #{minibatch_stat_concat.2} parent=8 // pred_check_branch
        %340 = sbr.rel (0) target = $region13
      $region12: #{minibatch_stat_concat.2} parent=8 // pred_region
        // Predicated region
        $region14: #{minibatch_stat_concat.2} parent=12 // pred_check
          _
        $region15: #{minibatch_stat_concat.2} parent=12 // pred_check_branch
          %342 = sbr.rel (0) target = $region17
        $region16: #{minibatch_stat_concat.2} parent=12 // pred_region
          loop: start=0, step=1, limit=1
          $region18: #{minibatch_stat_concat.2} parent=16 // loop_pre_header
            _
          $region19: #{minibatch_stat_concat.2} parent=16 // loop_header
            %s344 = sphi 0, %s348
            %p345 = scmp.ge.s32.totalorder %s344, 1
            %s349 = sphi [#allocation2], [#allocation2]
            %s350 = sphi %s1, %s1
          $region20: #{minibatch_stat_concat.2} parent=16 // loop_header_branch
            %347 = sbr.rel (%p345) target = $region24
          $region21: #{minibatch_stat_concat.2} parent=16 // loop_body
            %v351 = vld [vmem:[%s349] sm:$0xff]
            %352 = vst [vmem:[%s350] sm:$0xff] %v351
            %v353 = vld [vmem:[%s349 + $0x8] sm:$0xff]
            %354 = vst [vmem:[%s350 + $0x8] sm:$0xff] %v353
          $region22: #{minibatch_stat_concat.2} parent=16 // loop_footer
            %s348 = sadd.s32 1, %s344
          $region23: #{minibatch_stat_concat.2} parent=16 // loop_footer_branch
            %343 = sbr.rel target = $region19
          $region24: #{minibatch_stat_concat.2} parent=16 // loop_exit
            _
        $region17: #{minibatch_stat_concat.2} parent=12 // pred_fallthru
          _
        // Predicated region
        $region25: #{minibatch_stat_concat.2} parent=12 // pred_check
          _
        $region26: #{minibatch_stat_concat.2} parent=12 // pred_check_branch
          %356 = sbr.rel target = $region28
        $region27: #{minibatch_stat_concat.2} parent=12 // pred_region
          _
        $region28: #{minibatch_stat_concat.2} parent=12 // pred_fallthru
          _
      $region13: #{minibatch_stat_concat.2} parent=8 // pred_fallthru
        _
      %357 = vnop
    $region9: #{minibatch_stat_concat.2} parent=1 // pred_fallthru
      _
    // Predicated region
    $region29: #{minibatch_stat_concat.2} parent=1 // pred_check
      _
    $region30: #{minibatch_stat_concat.2} parent=1 // pred_check_branch
      %359 = sbr.rel (0) target = $region32
    $region31: #{minibatch_stat_concat.2} parent=1 // pred_region
      _
    $region32: #{minibatch_stat_concat.2} parent=1 // pred_fallthru
      _
    // Predicated region
    $region33: #{minibatch_stat_concat.2} parent=1 // pred_check
      _
    $region34: #{minibatch_stat_concat.2} parent=1 // pred_check_branch
      %361 = sbr.rel (0) target = $region36
    $region35: #{minibatch_stat_concat.2} parent=1 // pred_region
      _
    $region36: #{minibatch_stat_concat.2} parent=1 // pred_fallthru
      _
    // Predicated region
    $region37: #{minibatch_stat_concat.2} parent=1 // pred_check
      _
    $region38: #{minibatch_stat_concat.2} parent=1 // pred_check_branch
      %363 = sbr.rel (0) target = $region40
    $region39: #{minibatch_stat_concat.2} parent=1 // pred_region
      _
    $region40: #{minibatch_stat_concat.2} parent=1 // pred_fallthru
      _

// kernel: minibatch_stat_concat.3
$region0: #{minibatch_stat_concat.3}
  #allocation0 [shape = 'u32[]', space=smem, size = 0x4, offset = 0x4, fixed_abs, tag = 'smem constant byte address 0x4 - core index']
  #allocation1 [shape = 'u32[144,128]{1,0:T(1,128)}', space=vmem, size = 0x12000, scoped, tag = 'internal scratch']
  #allocation2 [shape = 'f32[1,1]{1,0:T(1,128)S(1)}', space=vmem, size = 0x200, scoped, tag = 'scoped memory for minibatch_stat_concat.3']
  %s0 = inlined_call_operand.<no memory space> [shape: f32[1,1], index: 0, kind: input, shape index: {}]
  %s1 = inlined_call_operand.vmem [shape: f32[2,1280], index: 1, kind: input, shape index: {}, may-alias: {1,2}]
  %s2 = inlined_call_operand.vmem [shape: f32[2,1280], index: 2, kind: output, shape index: {}, may-alias: {1,2}]
  %s3 = sld [smem:[#allocation0]]
  $region80: #{minibatch_stat_concat.3} parent=0
    _
  %s5 = ssub.s32 1, %s3
  %s6 = scalar_select 0, %s5, %s3
  %v7 = vstv %s0
  %8 = vst [vmem:[#allocation2] sm:$0x1] %v7
  $region1: #{minibatch_stat_concat.3} parent=0
    #allocation3 [shape = 'u8[8192]{0}', space=vmem, size = 0x2000, scoped, tag = 'output window, operand 0, single buffered']
    // Predicated region
    $region2: #{minibatch_stat_concat.3} parent=1 // pred_check
      _
    $region3: #{minibatch_stat_concat.3} parent=1 // pred_check_branch
      %10 = sbr.rel (0) target = $region5
    $region4: #{minibatch_stat_concat.3} parent=1 // pred_region
      _
    $region5: #{minibatch_stat_concat.3} parent=1 // pred_fallthru
      _
    // Predicated region
    $region6: #{minibatch_stat_concat.3} parent=1 // pred_check
      _
    $region7: #{minibatch_stat_concat.3} parent=1 // pred_check_branch
      %12 = sbr.rel (0) target = $region9
    $region8: #{minibatch_stat_concat.3} parent=1 // pred_region
      %s13 = scalar_lea.vmem %s1, 16
    $region9: #{minibatch_stat_concat.3} parent=1 // pred_fallthru
      _
    %s14 = scalar_lea.vmem %s1, 16
    %s15 = scalar_lea.vmem %s1, 16
    %s16 = sadd.s32 0, 1
    %s17 = smul.u32 8, %s16
    %s18 = ssub.s32 10, %s17
    %p19 = scmp.lt.s32.totalorder %s18, 8
    %s20 = scalar_select %p19, %s18, 8
    %s21 = smul.u32 32, %s20
    %v22 = vld [vmem:[#allocation2] sm:$0x1]
    %v24 = vlaneseq
    %v25 = vshrl.u32 %v24, 7
    %v26 = vsub.s32 0, %v25
    %v27 = vrot.slane %v22, %v26
    %28 = vset.pattern.permute.xlu0 0
    %29 = vperm.xlu0 %28, %v27
    %v30 = vpop.permute.xlu0 %29
    %32 = vst [vmem:[#allocation3] sm:$0xff] %v30
    %33 = vst [vmem:[#allocation3 + $0x8] sm:$0xff] %v30
    // Predicated region
    $region10: #{minibatch_stat_concat.3} parent=1 // pred_check
      _
    $region11: #{minibatch_stat_concat.3} parent=1 // pred_check_branch
      %35 = sbr.rel (0) target = $region13
    $region12: #{minibatch_stat_concat.3} parent=1 // pred_region
      %s36 = sadd.s32 0, 1
      %s37 = smul.u32 8, %s36
      %s38 = ssub.s32 10, %s37
      %p39 = scmp.lt.s32.totalorder %s38, 8
      %s40 = scalar_select %p39, %s38, 8
      %s41 = smul.u32 32, %s40
      %p42 = scmp.ne.s32.totalorder 0, %s41
      %s43 = smul.addr %s37, 2
      %s44 = scalar_lea.vmem %s2, %s43
      %s45 = smul.u32 %s40, 2
      // Predicated region
      $region14: #{minibatch_stat_concat.3} parent=12 // pred_check
        %p46 = pneg %p42
      $region15: #{minibatch_stat_concat.3} parent=12 // pred_check_branch
        %48 = sbr.rel (%p46) target = $region17
      $region16: #{minibatch_stat_concat.3} parent=12 // pred_region
        %p49 = scmp.lt.u32.totalorder %s45, 8
        %p50 = pneg %p49
        // Predicated region
        $region18: #{minibatch_stat_concat.3} parent=16 // pred_check
          _
        $region19: #{minibatch_stat_concat.3} parent=16 // pred_check_branch
          %52 = sbr.rel (%p49) target = $region21
        $region20: #{minibatch_stat_concat.3} parent=16 // pred_region
          %s67 = sand.u32 %s45, 7
          %p68 = scmp.eq.s32.totalorder %s67, 0
          // Predicated region
          $region33: #{minibatch_stat_concat.3} parent=20 // pred_check
            %p69 = pneg %p68
          $region34: #{minibatch_stat_concat.3} parent=20 // pred_check_branch
            %71 = sbr.rel (%p69) target = $region36
          $region35: #{minibatch_stat_concat.3} parent=20 // pred_region
            %s72 = sshrl.u32 %s45, 3
            %s73 = sshrl.u32 %s72, 6
            // While loop
            $region37: #{minibatch_stat_concat.3} parent=35 // loop_pre_header
              _
            $region38: #{minibatch_stat_concat.3} parent=35 // loop_header
              %s77 = sphi 0, %s79
              %p78 = scmp.ge.s32.totalorder %s77, %s73
              %s82 = sphi 0, %s215
              %s83 = sphi [#allocation3], %s218
              %s84 = sphi %s44, %s219
            $region39: #{minibatch_stat_concat.3} parent=35 // loop_header_branch
              %81 = sbr.rel (%p78) target = $region43
            $region40: #{minibatch_stat_concat.3} parent=35 // loop_body
              %v85 = vld [vmem:[%s83] sm:$0xff]
              %86 = vst [vmem:[%s84] sm:$0xff] %v85
              %v87 = vld [vmem:[%s83 + $0x8] sm:$0xff]
              %88 = vst [vmem:[%s84 + $0x8] sm:$0xff] %v87
              %v89 = vld [vmem:[%s83 + $0x10] sm:$0xff]
              %90 = vst [vmem:[%s84 + $0x10] sm:$0xff] %v89
              %v91 = vld [vmem:[%s83 + $0x18] sm:$0xff]
              %92 = vst [vmem:[%s84 + $0x18] sm:$0xff] %v91
              %v93 = vld [vmem:[%s83 + $0x20] sm:$0xff]
              %94 = vst [vmem:[%s84 + $0x20] sm:$0xff] %v93
              %v95 = vld [vmem:[%s83 + $0x28] sm:$0xff]
              %96 = vst [vmem:[%s84 + $0x28] sm:$0xff] %v95
              %v97 = vld [vmem:[%s83 + $0x30] sm:$0xff]
              %98 = vst [vmem:[%s84 + $0x30] sm:$0xff] %v97
              %v99 = vld [vmem:[%s83 + $0x38] sm:$0xff]
              %100 = vst [vmem:[%s84 + $0x38] sm:$0xff] %v99
              %v101 = vld [vmem:[%s83 + $0x40] sm:$0xff]
              %102 = vst [vmem:[%s84 + $0x40] sm:$0xff] %v101
              %v103 = vld [vmem:[%s83 + $0x48] sm:$0xff]
              %104 = vst [vmem:[%s84 + $0x48] sm:$0xff] %v103
              %v105 = vld [vmem:[%s83 + $0x50] sm:$0xff]
              %106 = vst [vmem:[%s84 + $0x50] sm:$0xff] %v105
              %v107 = vld [vmem:[%s83 + $0x58] sm:$0xff]
              %108 = vst [vmem:[%s84 + $0x58] sm:$0xff] %v107
              %v109 = vld [vmem:[%s83 + $0x60] sm:$0xff]
              %110 = vst [vmem:[%s84 + $0x60] sm:$0xff] %v109
              %v111 = vld [vmem:[%s83 + $0x68] sm:$0xff]
              %112 = vst [vmem:[%s84 + $0x68] sm:$0xff] %v111
              %v113 = vld [vmem:[%s83 + $0x70] sm:$0xff]
              %114 = vst [vmem:[%s84 + $0x70] sm:$0xff] %v113
              %v115 = vld [vmem:[%s83 + $0x78] sm:$0xff]
              %116 = vst [vmem:[%s84 + $0x78] sm:$0xff] %v115
              %v117 = vld [vmem:[%s83 + $0x80] sm:$0xff]
              %118 = vst [vmem:[%s84 + $0x80] sm:$0xff] %v117
              %v119 = vld [vmem:[%s83 + $0x88] sm:$0xff]
              %120 = vst [vmem:[%s84 + $0x88] sm:$0xff] %v119
              %v121 = vld [vmem:[%s83 + $0x90] sm:$0xff]
              %122 = vst [vmem:[%s84 + $0x90] sm:$0xff] %v121
              %v123 = vld [vmem:[%s83 + $0x98] sm:$0xff]
              %124 = vst [vmem:[%s84 + $0x98] sm:$0xff] %v123
              %v125 = vld [vmem:[%s83 + $0xa0] sm:$0xff]
              %126 = vst [vmem:[%s84 + $0xa0] sm:$0xff] %v125
              %v127 = vld [vmem:[%s83 + $0xa8] sm:$0xff]
              %128 = vst [vmem:[%s84 + $0xa8] sm:$0xff] %v127
              %v129 = vld [vmem:[%s83 + $0xb0] sm:$0xff]
              %130 = vst [vmem:[%s84 + $0xb0] sm:$0xff] %v129
              %v131 = vld [vmem:[%s83 + $0xb8] sm:$0xff]
              %132 = vst [vmem:[%s84 + $0xb8] sm:$0xff] %v131
              %v133 = vld [vmem:[%s83 + $0xc0] sm:$0xff]
              %134 = vst [vmem:[%s84 + $0xc0] sm:$0xff] %v133
              %v135 = vld [vmem:[%s83 + $0xc8] sm:$0xff]
              %136 = vst [vmem:[%s84 + $0xc8] sm:$0xff] %v135
              %v137 = vld [vmem:[%s83 + $0xd0] sm:$0xff]
              %138 = vst [vmem:[%s84 + $0xd0] sm:$0xff] %v137
              %v139 = vld [vmem:[%s83 + $0xd8] sm:$0xff]
              %140 = vst [vmem:[%s84 + $0xd8] sm:$0xff] %v139
              %v141 = vld [vmem:[%s83 + $0xe0] sm:$0xff]
              %142 = vst [vmem:[%s84 + $0xe0] sm:$0xff] %v141
              %v143 = vld [vmem:[%s83 + $0xe8] sm:$0xff]
              %144 = vst [vmem:[%s84 + $0xe8] sm:$0xff] %v143
              %v145 = vld [vmem:[%s83 + $0xf0] sm:$0xff]
              %146 = vst [vmem:[%s84 + $0xf0] sm:$0xff] %v145
              %v147 = vld [vmem:[%s83 + $0xf8] sm:$0xff]
              %148 = vst [vmem:[%s84 + $0xf8] sm:$0xff] %v147
              %v149 = vld [vmem:[%s83 + $0x100] sm:$0xff]
              %150 = vst [vmem:[%s84 + $0x100] sm:$0xff] %v149
              %v151 = vld [vmem:[%s83 + $0x108] sm:$0xff]
              %152 = vst [vmem:[%s84 + $0x108] sm:$0xff] %v151
              %v153 = vld [vmem:[%s83 + $0x110] sm:$0xff]
              %154 = vst [vmem:[%s84 + $0x110] sm:$0xff] %v153
              %v155 = vld [vmem:[%s83 + $0x118] sm:$0xff]
              %156 = vst [vmem:[%s84 + $0x118] sm:$0xff] %v155
              %v157 = vld [vmem:[%s83 + $0x120] sm:$0xff]
              %158 = vst [vmem:[%s84 + $0x120] sm:$0xff] %v157
              %v159 = vld [vmem:[%s83 + $0x128] sm:$0xff]
              %160 = vst [vmem:[%s84 + $0x128] sm:$0xff] %v159
              %v161 = vld [vmem:[%s83 + $0x130] sm:$0xff]
              %162 = vst [vmem:[%s84 + $0x130] sm:$0xff] %v161
              %v163 = vld [vmem:[%s83 + $0x138] sm:$0xff]
              %164 = vst [vmem:[%s84 + $0x138] sm:$0xff] %v163
              %v165 = vld [vmem:[%s83 + $0x140] sm:$0xff]
              %166 = vst [vmem:[%s84 + $0x140] sm:$0xff] %v165
              %v167 = vld [vmem:[%s83 + $0x148] sm:$0xff]
              %168 = vst [vmem:[%s84 + $0x148] sm:$0xff] %v167
              %v169 = vld [vmem:[%s83 + $0x150] sm:$0xff]
              %170 = vst [vmem:[%s84 + $0x150] sm:$0xff] %v169
              %v171 = vld [vmem:[%s83 + $0x158] sm:$0xff]
              %172 = vst [vmem:[%s84 + $0x158] sm:$0xff] %v171
              %v173 = vld [vmem:[%s83 + $0x160] sm:$0xff]
              %174 = vst [vmem:[%s84 + $0x160] sm:$0xff] %v173
              %v175 = vld [vmem:[%s83 + $0x168] sm:$0xff]
              %176 = vst [vmem:[%s84 + $0x168] sm:$0xff] %v175
              %v177 = vld [vmem:[%s83 + $0x170] sm:$0xff]
              %178 = vst [vmem:[%s84 + $0x170] sm:$0xff] %v177
              %v179 = vld [vmem:[%s83 + $0x178] sm:$0xff]
              %180 = vst [vmem:[%s84 + $0x178] sm:$0xff] %v179
              %v181 = vld [vmem:[%s83 + $0x180] sm:$0xff]
              %182 = vst [vmem:[%s84 + $0x180] sm:$0xff] %v181
              %v183 = vld [vmem:[%s83 + $0x188] sm:$0xff]
              %184 = vst [vmem:[%s84 + $0x188] sm:$0xff] %v183
              %v185 = vld [vmem:[%s83 + $0x190] sm:$0xff]
              %186 = vst [vmem:[%s84 + $0x190] sm:$0xff] %v185
              %v187 = vld [vmem:[%s83 + $0x198] sm:$0xff]
              %188 = vst [vmem:[%s84 + $0x198] sm:$0xff] %v187
              %v189 = vld [vmem:[%s83 + $0x1a0] sm:$0xff]
              %190 = vst [vmem:[%s84 + $0x1a0] sm:$0xff] %v189
              %v191 = vld [vmem:[%s83 + $0x1a8] sm:$0xff]
              %192 = vst [vmem:[%s84 + $0x1a8] sm:$0xff] %v191
              %v193 = vld [vmem:[%s83 + $0x1b0] sm:$0xff]
              %194 = vst [vmem:[%s84 + $0x1b0] sm:$0xff] %v193
              %v195 = vld [vmem:[%s83 + $0x1b8] sm:$0xff]
              %196 = vst [vmem:[%s84 + $0x1b8] sm:$0xff] %v195
              %v197 = vld [vmem:[%s83 + $0x1c0] sm:$0xff]
              %198 = vst [vmem:[%s84 + $0x1c0] sm:$0xff] %v197
              %v199 = vld [vmem:[%s83 + $0x1c8] sm:$0xff]
              %200 = vst [vmem:[%s84 + $0x1c8] sm:$0xff] %v199
              %v201 = vld [vmem:[%s83 + $0x1d0] sm:$0xff]
              %202 = vst [vmem:[%s84 + $0x1d0] sm:$0xff] %v201
              %v203 = vld [vmem:[%s83 + $0x1d8] sm:$0xff]
              %204 = vst [vmem:[%s84 + $0x1d8] sm:$0xff] %v203
              %v205 = vld [vmem:[%s83 + $0x1e0] sm:$0xff]
              %206 = vst [vmem:[%s84 + $0x1e0] sm:$0xff] %v205
              %v207 = vld [vmem:[%s83 + $0x1e8] sm:$0xff]
              %208 = vst [vmem:[%s84 + $0x1e8] sm:$0xff] %v207
              %v209 = vld [vmem:[%s83 + $0x1f0] sm:$0xff]
              %210 = vst [vmem:[%s84 + $0x1f0] sm:$0xff] %v209
              %v211 = vld [vmem:[%s83 + $0x1f8] sm:$0xff]
              %212 = vst [vmem:[%s84 + $0x1f8] sm:$0xff] %v211
              %s213 = sadd.s32 1, %s82
              %p214 = scmp.ge.s32.totalorder %s213, %s73
              %s215 = scalar_select %p214, 0, %s213
              %s216 = smul.u32 %s215, 512
              %s217 = smul.u32 %s215, 512
              %s218 = scalar_lea.vmem [#allocation3], %s216
              %s219 = scalar_lea.vmem %s44, %s217
            $region41: #{minibatch_stat_concat.3} parent=35 // loop_footer
              %s79 = sadd.s32 %s77, 1
            $region42: #{minibatch_stat_concat.3} parent=35 // loop_footer_branch
              %76 = sbr.rel target = $region38
            $region43: #{minibatch_stat_concat.3} parent=35 // loop_exit
              _
            %s220 = sshrl.u32 %s72, 6
            %s221 = sand.u32 %s72, 63
            %s222 = smul.u32 %s220, 64
            %s223 = smul.u32 128, %s222
            %s224 = sshra.s32 %s223, 4
            %s225 = scalar_lea.vmem [#allocation3], %s224
            %s226 = smul.u32 128, %s222
            %s227 = sshra.s32 %s226, 4
            %s228 = scalar_lea.vmem %s44, %s227
            // While loop
            $region44: #{minibatch_stat_concat.3} parent=35 // loop_pre_header
              _
            $region45: #{minibatch_stat_concat.3} parent=35 // loop_header
              %s232 = sphi 0, %s234
              %p233 = scmp.ge.s32.totalorder %s232, %s221
              %s237 = sphi 0, %s244
              %s238 = sphi %s225, %s247
              %s239 = sphi %s228, %s248
            $region46: #{minibatch_stat_concat.3} parent=35 // loop_header_branch
              %236 = sbr.rel (%p233) target = $region50
            $region47: #{minibatch_stat_concat.3} parent=35 // loop_body
              %v240 = vld [vmem:[%s238] sm:$0xff]
              %241 = vst [vmem:[%s239] sm:$0xff] %v240
              %s242 = sadd.s32 1, %s237
              %p243 = scmp.ge.s32.totalorder %s242, %s221
              %s244 = scalar_select %p243, 0, %s242
              %s245 = smul.u32 %s244, 8
              %s246 = smul.u32 %s244, 8
              %s247 = scalar_lea.vmem %s225, %s245 [#allocation3]
              %s248 = scalar_lea.vmem %s228, %s246
            $region48: #{minibatch_stat_concat.3} parent=35 // loop_footer
              %s234 = sadd.s32 %s232, 1
            $region49: #{minibatch_stat_concat.3} parent=35 // loop_footer_branch
              %231 = sbr.rel target = $region45
            $region50: #{minibatch_stat_concat.3} parent=35 // loop_exit
              _
          $region36: #{minibatch_stat_concat.3} parent=20 // pred_fallthru
            _
          %p249 = pneg %p68
          // Predicated region
          $region51: #{minibatch_stat_concat.3} parent=20 // pred_check
            _
          $region52: #{minibatch_stat_concat.3} parent=20 // pred_check_branch
            %251 = sbr.rel (%p68) target = $region54
          $region53: #{minibatch_stat_concat.3} parent=20 // pred_region
            %s252 = sand.u32 %s45, 7
            %s253 = ssub.s32 %s45, %s252
            %s254 = scalar_lea.vmem [#allocation3], %s253
            %s255 = ssub.s32 %s45, %s252
            %s256 = scalar_lea.vmem %s44, %s255
            %s257 = sshrl.u32 %s45, 3
            %s258 = sshrl.u32 %s257, 6
            // While loop
            $region55: #{minibatch_stat_concat.3} parent=53 // loop_pre_header
              _
            $region56: #{minibatch_stat_concat.3} parent=53 // loop_header
              %s262 = sphi 0, %s264
              %p263 = scmp.ge.s32.totalorder %s262, %s258
              %s267 = sphi 0, %s400
              %s268 = sphi [#allocation3], %s403
              %s269 = sphi %s44, %s404
            $region57: #{minibatch_stat_concat.3} parent=53 // loop_header_branch
              %266 = sbr.rel (%p263) target = $region61
            $region58: #{minibatch_stat_concat.3} parent=53 // loop_body
              %v270 = vld [vmem:[%s268] sm:$0xff]
              %271 = vst [vmem:[%s269] sm:$0xff] %v270
              %v272 = vld [vmem:[%s268 + $0x8] sm:$0xff]
              %273 = vst [vmem:[%s269 + $0x8] sm:$0xff] %v272
              %v274 = vld [vmem:[%s268 + $0x10] sm:$0xff]
              %275 = vst [vmem:[%s269 + $0x10] sm:$0xff] %v274
              %v276 = vld [vmem:[%s268 + $0x18] sm:$0xff]
              %277 = vst [vmem:[%s269 + $0x18] sm:$0xff] %v276
              %v278 = vld [vmem:[%s268 + $0x20] sm:$0xff]
              %279 = vst [vmem:[%s269 + $0x20] sm:$0xff] %v278
              %v280 = vld [vmem:[%s268 + $0x28] sm:$0xff]
              %281 = vst [vmem:[%s269 + $0x28] sm:$0xff] %v280
              %v282 = vld [vmem:[%s268 + $0x30] sm:$0xff]
              %283 = vst [vmem:[%s269 + $0x30] sm:$0xff] %v282
              %v284 = vld [vmem:[%s268 + $0x38] sm:$0xff]
              %285 = vst [vmem:[%s269 + $0x38] sm:$0xff] %v284
              %v286 = vld [vmem:[%s268 + $0x40] sm:$0xff]
              %287 = vst [vmem:[%s269 + $0x40] sm:$0xff] %v286
              %v288 = vld [vmem:[%s268 + $0x48] sm:$0xff]
              %289 = vst [vmem:[%s269 + $0x48] sm:$0xff] %v288
              %v290 = vld [vmem:[%s268 + $0x50] sm:$0xff]
              %291 = vst [vmem:[%s269 + $0x50] sm:$0xff] %v290
              %v292 = vld [vmem:[%s268 + $0x58] sm:$0xff]
              %293 = vst [vmem:[%s269 + $0x58] sm:$0xff] %v292
              %v294 = vld [vmem:[%s268 + $0x60] sm:$0xff]
              %295 = vst [vmem:[%s269 + $0x60] sm:$0xff] %v294
              %v296 = vld [vmem:[%s268 + $0x68] sm:$0xff]
              %297 = vst [vmem:[%s269 + $0x68] sm:$0xff] %v296
              %v298 = vld [vmem:[%s268 + $0x70] sm:$0xff]
              %299 = vst [vmem:[%s269 + $0x70] sm:$0xff] %v298
              %v300 = vld [vmem:[%s268 + $0x78] sm:$0xff]
              %301 = vst [vmem:[%s269 + $0x78] sm:$0xff] %v300
              %v302 = vld [vmem:[%s268 + $0x80] sm:$0xff]
              %303 = vst [vmem:[%s269 + $0x80] sm:$0xff] %v302
              %v304 = vld [vmem:[%s268 + $0x88] sm:$0xff]
              %305 = vst [vmem:[%s269 + $0x88] sm:$0xff] %v304
              %v306 = vld [vmem:[%s268 + $0x90] sm:$0xff]
              %307 = vst [vmem:[%s269 + $0x90] sm:$0xff] %v306
              %v308 = vld [vmem:[%s268 + $0x98] sm:$0xff]
              %309 = vst [vmem:[%s269 + $0x98] sm:$0xff] %v308
              %v310 = vld [vmem:[%s268 + $0xa0] sm:$0xff]
              %311 = vst [vmem:[%s269 + $0xa0] sm:$0xff] %v310
              %v312 = vld [vmem:[%s268 + $0xa8] sm:$0xff]
              %313 = vst [vmem:[%s269 + $0xa8] sm:$0xff] %v312
              %v314 = vld [vmem:[%s268 + $0xb0] sm:$0xff]
              %315 = vst [vmem:[%s269 + $0xb0] sm:$0xff] %v314
              %v316 = vld [vmem:[%s268 + $0xb8] sm:$0xff]
              %317 = vst [vmem:[%s269 + $0xb8] sm:$0xff] %v316
              %v318 = vld [vmem:[%s268 + $0xc0] sm:$0xff]
              %319 = vst [vmem:[%s269 + $0xc0] sm:$0xff] %v318
              %v320 = vld [vmem:[%s268 + $0xc8] sm:$0xff]
              %321 = vst [vmem:[%s269 + $0xc8] sm:$0xff] %v320
              %v322 = vld [vmem:[%s268 + $0xd0] sm:$0xff]
              %323 = vst [vmem:[%s269 + $0xd0] sm:$0xff] %v322
              %v324 = vld [vmem:[%s268 + $0xd8] sm:$0xff]
              %325 = vst [vmem:[%s269 + $0xd8] sm:$0xff] %v324
              %v326 = vld [vmem:[%s268 + $0xe0] sm:$0xff]
              %327 = vst [vmem:[%s269 + $0xe0] sm:$0xff] %v326
              %v328 = vld [vmem:[%s268 + $0xe8] sm:$0xff]
              %329 = vst [vmem:[%s269 + $0xe8] sm:$0xff] %v328
              %v330 = vld [vmem:[%s268 + $0xf0] sm:$0xff]
              %331 = vst [vmem:[%s269 + $0xf0] sm:$0xff] %v330
              %v332 = vld [vmem:[%s268 + $0xf8] sm:$0xff]
              %333 = vst [vmem:[%s269 + $0xf8] sm:$0xff] %v332
              %v334 = vld [vmem:[%s268 + $0x100] sm:$0xff]
              %335 = vst [vmem:[%s269 + $0x100] sm:$0xff] %v334
              %v336 = vld [vmem:[%s268 + $0x108] sm:$0xff]
              %337 = vst [vmem:[%s269 + $0x108] sm:$0xff] %v336
              %v338 = vld [vmem:[%s268 + $0x110] sm:$0xff]
              %339 = vst [vmem:[%s269 + $0x110] sm:$0xff] %v338
              %v340 = vld [vmem:[%s268 + $0x118] sm:$0xff]
              %341 = vst [vmem:[%s269 + $0x118] sm:$0xff] %v340
              %v342 = vld [vmem:[%s268 + $0x120] sm:$0xff]
              %343 = vst [vmem:[%s269 + $0x120] sm:$0xff] %v342
              %v344 = vld [vmem:[%s268 + $0x128] sm:$0xff]
              %345 = vst [vmem:[%s269 + $0x128] sm:$0xff] %v344
              %v346 = vld [vmem:[%s268 + $0x130] sm:$0xff]
              %347 = vst [vmem:[%s269 + $0x130] sm:$0xff] %v346
              %v348 = vld [vmem:[%s268 + $0x138] sm:$0xff]
              %349 = vst [vmem:[%s269 + $0x138] sm:$0xff] %v348
              %v350 = vld [vmem:[%s268 + $0x140] sm:$0xff]
              %351 = vst [vmem:[%s269 + $0x140] sm:$0xff] %v350
              %v352 = vld [vmem:[%s268 + $0x148] sm:$0xff]
              %353 = vst [vmem:[%s269 + $0x148] sm:$0xff] %v352
              %v354 = vld [vmem:[%s268 + $0x150] sm:$0xff]
              %355 = vst [vmem:[%s269 + $0x150] sm:$0xff] %v354
              %v356 = vld [vmem:[%s268 + $0x158] sm:$0xff]
              %357 = vst [vmem:[%s269 + $0x158] sm:$0xff] %v356
              %v358 = vld [vmem:[%s268 + $0x160] sm:$0xff]
              %359 = vst [vmem:[%s269 + $0x160] sm:$0xff] %v358
              %v360 = vld [vmem:[%s268 + $0x168] sm:$0xff]
              %361 = vst [vmem:[%s269 + $0x168] sm:$0xff] %v360
              %v362 = vld [vmem:[%s268 + $0x170] sm:$0xff]
              %363 = vst [vmem:[%s269 + $0x170] sm:$0xff] %v362
              %v364 = vld [vmem:[%s268 + $0x178] sm:$0xff]
              %365 = vst [vmem:[%s269 + $0x178] sm:$0xff] %v364
              %v366 = vld [vmem:[%s268 + $0x180] sm:$0xff]
              %367 = vst [vmem:[%s269 + $0x180] sm:$0xff] %v366
              %v368 = vld [vmem:[%s268 + $0x188] sm:$0xff]
              %369 = vst [vmem:[%s269 + $0x188] sm:$0xff] %v368
              %v370 = vld [vmem:[%s268 + $0x190] sm:$0xff]
              %371 = vst [vmem:[%s269 + $0x190] sm:$0xff] %v370
              %v372 = vld [vmem:[%s268 + $0x198] sm:$0xff]
              %373 = vst [vmem:[%s269 + $0x198] sm:$0xff] %v372
              %v374 = vld [vmem:[%s268 + $0x1a0] sm:$0xff]
              %375 = vst [vmem:[%s269 + $0x1a0] sm:$0xff] %v374
              %v376 = vld [vmem:[%s268 + $0x1a8] sm:$0xff]
              %377 = vst [vmem:[%s269 + $0x1a8] sm:$0xff] %v376
              %v378 = vld [vmem:[%s268 + $0x1b0] sm:$0xff]
              %379 = vst [vmem:[%s269 + $0x1b0] sm:$0xff] %v378
              %v380 = vld [vmem:[%s268 + $0x1b8] sm:$0xff]
              %381 = vst [vmem:[%s269 + $0x1b8] sm:$0xff] %v380
              %v382 = vld [vmem:[%s268 + $0x1c0] sm:$0xff]
              %383 = vst [vmem:[%s269 + $0x1c0] sm:$0xff] %v382
              %v384 = vld [vmem:[%s268 + $0x1c8] sm:$0xff]
              %385 = vst [vmem:[%s269 + $0x1c8] sm:$0xff] %v384
              %v386 = vld [vmem:[%s268 + $0x1d0] sm:$0xff]
              %387 = vst [vmem:[%s269 + $0x1d0] sm:$0xff] %v386
              %v388 = vld [vmem:[%s268 + $0x1d8] sm:$0xff]
              %389 = vst [vmem:[%s269 + $0x1d8] sm:$0xff] %v388
              %v390 = vld [vmem:[%s268 + $0x1e0] sm:$0xff]
              %391 = vst [vmem:[%s269 + $0x1e0] sm:$0xff] %v390
              %v392 = vld [vmem:[%s268 + $0x1e8] sm:$0xff]
              %393 = vst [vmem:[%s269 + $0x1e8] sm:$0xff] %v392
              %v394 = vld [vmem:[%s268 + $0x1f0] sm:$0xff]
              %395 = vst [vmem:[%s269 + $0x1f0] sm:$0xff] %v394
              %v396 = vld [vmem:[%s268 + $0x1f8] sm:$0xff]
              %397 = vst [vmem:[%s269 + $0x1f8] sm:$0xff] %v396
              %s398 = sadd.s32 1, %s267
              %p399 = scmp.ge.s32.totalorder %s398, %s258
              %s400 = scalar_select %p399, 0, %s398
              %s401 = smul.u32 %s400, 512
              %s402 = smul.u32 %s400, 512
              %s403 = scalar_lea.vmem [#allocation3], %s401
              %s404 = scalar_lea.vmem %s44, %s402
            $region59: #{minibatch_stat_concat.3} parent=53 // loop_footer
              %s264 = sadd.s32 %s262, 1
            $region60: #{minibatch_stat_concat.3} parent=53 // loop_footer_branch
              %261 = sbr.rel target = $region56
            $region61: #{minibatch_stat_concat.3} parent=53 // loop_exit
              _
            %s405 = sshrl.u32 %s257, 6
            %s406 = sand.u32 %s257, 63
            %s407 = smul.u32 %s405, 64
            %s408 = smul.u32 128, %s407
            %s409 = sshra.s32 %s408, 4
            %s410 = scalar_lea.vmem [#allocation3], %s409
            %s411 = smul.u32 128, %s407
            %s412 = sshra.s32 %s411, 4
            %s413 = scalar_lea.vmem %s44, %s412
            // While loop
            $region62: #{minibatch_stat_concat.3} parent=53 // loop_pre_header
              _
            $region63: #{minibatch_stat_concat.3} parent=53 // loop_header
              %s417 = sphi 0, %s419
              %p418 = scmp.ge.s32.totalorder %s417, %s406
              %s422 = sphi 0, %s429
              %s423 = sphi %s410, %s432
              %s424 = sphi %s413, %s433
            $region64: #{minibatch_stat_concat.3} parent=53 // loop_header_branch
              %421 = sbr.rel (%p418) target = $region68
            $region65: #{minibatch_stat_concat.3} parent=53 // loop_body
              %v425 = vld [vmem:[%s423] sm:$0xff]
              %426 = vst [vmem:[%s424] sm:$0xff] %v425
              %s427 = sadd.s32 1, %s422
              %p428 = scmp.ge.s32.totalorder %s427, %s406
              %s429 = scalar_select %p428, 0, %s427
              %s430 = smul.u32 %s429, 8
              %s431 = smul.u32 %s429, 8
              %s432 = scalar_lea.vmem %s410, %s430 [#allocation3]
              %s433 = scalar_lea.vmem %s413, %s431
            $region66: #{minibatch_stat_concat.3} parent=53 // loop_footer
              %s419 = sadd.s32 %s417, 1
            $region67: #{minibatch_stat_concat.3} parent=53 // loop_footer_branch
              %416 = sbr.rel target = $region63
            $region68: #{minibatch_stat_concat.3} parent=53 // loop_exit
              _
            %s434 = sshllo.u32 0, %s252
            loop: start=0, step=1, limit=1
            $region69: #{minibatch_stat_concat.3} parent=53 // loop_pre_header
              _
            $region70: #{minibatch_stat_concat.3} parent=53 // loop_header
              %s436 = sphi 0, %s440
              %p437 = scmp.ge.s32.totalorder %s436, 1
              %s441 = sphi %s254, %s254
              %s442 = sphi %s256, %s256
            $region71: #{minibatch_stat_concat.3} parent=53 // loop_header_branch
              %439 = sbr.rel (%p437) target = $region75
            $region72: #{minibatch_stat_concat.3} parent=53 // loop_body
              %v443 = vld [vmem:[%s441] sm:%s434]
              %444 = vst [vmem:[%s442] sm:%s434] %v443
            $region73: #{minibatch_stat_concat.3} parent=53 // loop_footer
              %s440 = sadd.s32 1, %s436
            $region74: #{minibatch_stat_concat.3} parent=53 // loop_footer_branch
              %435 = sbr.rel target = $region70
            $region75: #{minibatch_stat_concat.3} parent=53 // loop_exit
              _
          $region54: #{minibatch_stat_concat.3} parent=20 // pred_fallthru
            _
        $region21: #{minibatch_stat_concat.3} parent=16 // pred_fallthru
          _
        // Predicated region
        $region22: #{minibatch_stat_concat.3} parent=16 // pred_check
          %p53 = pneg %p49
        $region23: #{minibatch_stat_concat.3} parent=16 // pred_check_branch
          %55 = sbr.rel (%p53) target = $region25
        $region24: #{minibatch_stat_concat.3} parent=16 // pred_region
          %s56 = sshllo.u32 0, %s45
          loop: start=0, step=1, limit=1
          $region26: #{minibatch_stat_concat.3} parent=24 // loop_pre_header
            _
          $region27: #{minibatch_stat_concat.3} parent=24 // loop_header
            %s58 = sphi 0, %s62
            %p59 = scmp.ge.s32.totalorder %s58, 1
            %s63 = sphi [#allocation3], [#allocation3]
            %s64 = sphi %s44, %s44
          $region28: #{minibatch_stat_concat.3} parent=24 // loop_header_branch
            %61 = sbr.rel (%p59) target = $region32
          $region29: #{minibatch_stat_concat.3} parent=24 // loop_body
            %v65 = vld [vmem:[%s63] sm:%s56]
            %66 = vst [vmem:[%s64] sm:%s56] %v65
          $region30: #{minibatch_stat_concat.3} parent=24 // loop_footer
            %s62 = sadd.s32 1, %s58
          $region31: #{minibatch_stat_concat.3} parent=24 // loop_footer_branch
            %57 = sbr.rel target = $region27
          $region32: #{minibatch_stat_concat.3} parent=24 // loop_exit
            _
        $region25: #{minibatch_stat_concat.3} parent=16 // pred_fallthru
          _
      $region17: #{minibatch_stat_concat.3} parent=12 // pred_fallthru
        _
      %445 = vnop
    $region13: #{minibatch_stat_concat.3} parent=1 // pred_fallthru
      _
    // Predicated region
    $region76: #{minibatch_stat_concat.3} parent=1 // pred_check
      _
    $region77: #{minibatch_stat_concat.3} parent=1 // pred_check_branch
      %447 = sbr.rel (0) target = $region79
    $region78: #{minibatch_stat_concat.3} parent=1 // pred_region
      _
    $region79: #{minibatch_stat_concat.3} parent=1 // pred_fallthru
      _

</llo_original>
